<compile_context>
chip_gen: v7x
topology: tpu7x:2x2x1
jax: 0.10.0
libtpu: 0.0.40
codegen_flags: <defaults>
</compile_context>

<pallas_src>
import jax
import jax.numpy as jnp
from jax.experimental import pallas as pl
from jax.experimental.pallas import tpu as pltpu


def _identity_dma_copy_kernel(x_hbm_ref, o_hbm_ref, sem):
    # Single HBM->HBM DMA: the DMA engines stream the bytes directly; the
    # TensorCore only issues the descriptor and waits on the semaphore.
    cp = pltpu.make_async_copy(x_hbm_ref, o_hbm_ref, sem)
    cp.start()
    cp.wait()


def pallas_identity_copy(x: jax.Array) -> jax.Array:
    """Identity that materializes an independent copy via one HBM->HBM DMA."""
    if x.size == 0:
        return x
    return pl.pallas_call(
        _identity_dma_copy_kernel,
        out_shape=jax.ShapeDtypeStruct(x.shape, x.dtype),
        in_specs=[pl.BlockSpec(memory_space=pl.ANY)],   # raw HBM ref, no auto-DMA
        out_specs=pl.BlockSpec(memory_space=pl.ANY),    # raw HBM ref, no auto-DMA
        scratch_shapes=[pltpu.SemaphoreType.DMA(())],
    )(x)


def identity_first_stage_forward(x: jax.Array, *, use_pallas_copy: bool = False) -> jax.Array:
    """forward(x) == x. Default: zero-cost pass-through (no kernel, no HBM traffic)."""
    if use_pallas_copy:
        return pallas_identity_copy(x)
    return x


class IdentityFirstStage:
    """JAX/Pallas port of the PyTorch IdentityFirstStage module (no parameters)."""

    def __init__(self, *args, vq_interface: bool = False, use_pallas_copy: bool = False, **kwargs):
        self.vq_interface = vq_interface
        self.use_pallas_copy = use_pallas_copy

    def _identity(self, x):
        return identity_first_stage_forward(x, use_pallas_copy=self.use_pallas_copy)

    def encode(self, x, *args, **kwargs):
        return self._identity(x)

    def decode(self, x, *args, **kwargs):
        return self._identity(x)

    def quantize(self, x, *args, **kwargs):
        y = self._identity(x)
        if self.vq_interface:
            return (y, None, [None, None, None])
        return y

    def __call__(self, x, *args, **kwargs):
        return self._identity(x)


if __name__ == "__main__":
    import numpy as np

    key = jax.random.PRNGKey(0)
    # Small NCHW input consistent with a first-stage AE: batch=2, ch=4, 16x16.
    x = jax.random.normal(key, (2, 4, 16, 16), dtype=jnp.float32)
    x_host = np.asarray(x)

    # --- Default (optimal) path: pure pass-through, no kernel, no HBM round-trip. ---
    model = IdentityFirstStage(vq_interface=True)
    y = model(x)
    assert y.shape == x.shape and y.dtype == x.dtype
    assert jnp.array_equal(y, x)

    enc = model.encode(x)
    dec = model.decode(enc)
    q, _, extras = model.quantize(x)
    assert jnp.array_equal(enc, x)
    assert jnp.array_equal(dec, x)
    assert jnp.array_equal(q, x)
    assert extras == [None, None, None]

    # --- Explicit Pallas copy path: independent buffer via one HBM->HBM DMA. ---
    kernel_model = IdentityFirstStage(vq_interface=True, use_pallas_copy=True)
    y_kernel = kernel_model(x)
    y_kernel = jax.block_until_ready(y_kernel)
    assert y_kernel.shape == x_host.shape and y_kernel.dtype == jnp.float32
    np.testing.assert_array_equal(np.asarray(y_kernel), x_host)

    # quantize() through the kernel path as well (exercises the vq_interface tuple).
    q_k, _, extras_k = kernel_model.quantize(x)
    q_k = jax.block_until_ready(q_k)
    np.testing.assert_array_equal(np.asarray(q_k), x_host)
    assert extras_k == [None, None, None]

    print("KERNEL_OK")
</pallas_src>

<mosaic_0001>
module attributes {stable_mosaic.version = 11 : i64} {
  func.func @_identity_dma_copy_kernel(%arg0: memref<2x4x16x16xf32, #tpu.memory_space<any>>, %arg1: memref<2x4x16x16xf32, #tpu.memory_space<any>>, %arg2: memref<!tpu.dma_semaphore, #tpu.memory_space<semaphore_mem>>) attributes {dimension_semantics = [], scalar_prefetch = 0 : i64, scratch_operands = 1 : i64, tpu.core_type = #tpu.core_type<tc>} {
    tpu.enqueue_dma source(%arg0 : memref<2x4x16x16xf32, #tpu.memory_space<any>>) target(%arg1 : memref<2x4x16x16xf32, #tpu.memory_space<any>>) target_semaphore(%arg2 : memref<!tpu.dma_semaphore, #tpu.memory_space<semaphore_mem>>)
    tpu.wait_dma2 semaphore(%arg2 : memref<!tpu.dma_semaphore, #tpu.memory_space<semaphore_mem>>) src(%arg0 : memref<2x4x16x16xf32, #tpu.memory_space<any>>) dst(%arg1 : memref<2x4x16x16xf32, #tpu.memory_space<any>>)
    return
  }
}

</mosaic_0001>

<llo_original>
// kernel: tpu_custom_call.1
$region0: #{tpu_custom_call.1}
  #allocation0 [shape = 'u32[]', space=smem, size = 0x4, offset = 0x4, fixed_abs, tag = 'smem constant byte address 0x4 - core index']
  #allocation1 [shape = 'u32[144,128]{1,0:T(1,128)}', space=vmem, size = 0x12000, scoped, tag = 'internal scratch']
  #allocation2 [shape = 's32[1]{0}', space=sflag, size = 0x4, scoped, tag = 'scratch operand']
  #allocation3 [shape = 's32[]', space=sflag, size = 0x4, offset = 0, fixed_abs, tag = 'sflag constant byte address 0x0 - dummy sync flag']
  #allocation4 [shape = 'u32[0]{0}', space=smem, size = 0, offset = 0, fixed_abs, tag = 'smem constant byte address 0x0 - null']
  %s0 = inlined_call_operand.hbm [shape: f32[2,4,16,16], index: 0, kind: input, shape index: {}]
  %s1 = inlined_call_operand.hbm [shape: f32[2,4,16,16], index: 1, kind: output, shape index: {}]
  %s2 = sld [smem:[#allocation0]]
  $region2: #{tpu_custom_call.1} parent=0
    _
  %s4 = ssub.s32 1, %s2
  %s5 = scalar_select 0, %s4, %s2
  %s7 = sshll.u32 1, 14
  %s8 = sxor.u32 4294967295, %s7
  %s11 = sshll.u32 3, 24
  %s12 = sxor.u32 4294967295, %s11
  %s13 = sand.u32 0, %s12
  %s15 = sor.u32 %s13, 0
  %18 = dma.general %s0, 2048, %s1, [#allocation2], [#allocation3], [#allocation4], %s15, 0
  %s19 = smul.u32 2, 4
  %s20 = smul.u32 %s19, 16
  %s21 = smul.u32 %s20, 1
  %s22 = sshll.u32 %s21, 4
  %23 = dma.done [#allocation2], %s22
  %24 = vsyncmov [#allocation2]
  %s25 = vpop.sfrf %24
  %p26 = scmp.eq.s32.totalorder %s25, 0
  %p27 = pneg %p26
  %29 = shalt.err (%p27)

</llo_original>
